<compile_context>
chip_gen: v7x
topology: tpu7x:2x2x1
jax: 0.10.0
libtpu: 0.0.40
codegen_flags: <defaults>
</compile_context>

<pallas_src>
import functools

import jax
import jax.numpy as jnp
from jax.experimental import pallas as pl
from jax.experimental.pallas import tpu as pltpu


# ---------------------------------------------------------------------------
# Glue helpers (plain JAX): patch extraction (ZeroPad2d(1) + unfold), downsample
# ---------------------------------------------------------------------------
def _round_up(x, m):
    return (x + m - 1) // m * m


def extract_patches(x, size=3, step=1):
    """ZeroPad2d(1) then unfold; returns (B, L, C, size, size), patches h-major."""
    xp = jnp.pad(x, ((0, 0), (0, 0), (1, 1), (1, 1)))
    B, C, Hp, Wp = xp.shape
    oh = (Hp - size) // step + 1
    ow = (Wp - size) // step + 1
    hh = (jnp.arange(oh) * step)[:, None] + jnp.arange(size)[None, :]
    ww = (jnp.arange(ow) * step)[:, None] + jnp.arange(size)[None, :]
    p = xp[:, :, hh, :]                 # (B, C, oh, size, Wp)
    p = p[:, :, :, :, ww]               # (B, C, oh, size, ow, size)
    p = p.transpose(0, 2, 4, 1, 3, 5)   # (B, oh, ow, C, size, size)
    return p.reshape(B, oh * ow, C, size, size)


def nearest_downsample(x, rate):
    # F.interpolate(scale_factor=1/rate, mode='nearest') == strided pick
    return x[:, :, ::rate, ::rate]


# ---------------------------------------------------------------------------
# In-kernel helper: 3x3 identity-kernel conv ("fuse") with zero padding:
#   out[i, j] = a[i-1, j-1] + a[i, j] + a[i+1, j+1]
# Implemented as XLU rolls + edge masking (no MXU, no LxL shift constants).
# ---------------------------------------------------------------------------
def _diag_fuse(a):
    n_r, n_c = a.shape
    ri = jax.lax.broadcasted_iota(jnp.int32, a.shape, 0)
    ci = jax.lax.broadcasted_iota(jnp.int32, a.shape, 1)
    # shift by (+1, +1): wrapped first row / first column must be zero
    dr = pltpu.roll(pltpu.roll(a, 1, 1), 1, 0)
    dr = jnp.where(jnp.logical_or(ri == 0, ci == 0), 0.0, dr)
    # shift by (-1, -1) == (n-1, n-1): wrapped last row / last column zeroed
    ul = pltpu.roll(pltpu.roll(a, n_c - 1, 1), n_r - 1, 0)
    ul = jnp.where(jnp.logical_or(ri == n_r - 1, ci == n_c - 1), 0.0, ul)
    return a + dr + ul


# ---------------------------------------------------------------------------
# Pallas kernel A (per batch): L2-normalize bg patches, correlation matmul
# (bf16 operands, f32 accumulation), first "fuse".
# ---------------------------------------------------------------------------
def _score_fuse_kernel(wcols_ref, fT_ref, b1_ref):
    w = wcols_ref[0]                        # (L, C*9)  f32   3x3 bg patches
    fT = fT_ref[0]                          # (C*9, L)  bf16  im2col(fg)^T
    # L2-normalize each 3x3 patch, clamped at 1e-4 (torch.max(l2_norm, NaN))
    norm = jnp.sqrt(jnp.sum(w * w, axis=1, keepdims=True))
    inv = pl.reciprocal(jnp.maximum(norm, 1e-4), approx=True)   # EUP slot
    wn = (w * inv).astype(jnp.bfloat16)
    # F.conv2d(i_f, i_patches_normed, padding=1): scores[l_b, l_f]
    scores = jnp.dot(wn, fT, preferred_element_type=jnp.float32)
    b1_ref[0] = _diag_fuse(scores)


# ---------------------------------------------------------------------------
# Pallas kernel B (per batch): second "fuse", masked scaled softmax over the
# background-patch axis, per-column argmax (offsets), and the
# conv_transpose2d matmul (weighted sum of raw 4x4 patches).
# ---------------------------------------------------------------------------
def _fuse_softmax_agg_kernel(c1_ref, eq_ref, rawT_ref, pT_ref, off_ref, *, scale):
    c1 = c1_ref[0]                          # (L, L)   f32  permuted fused scores
    eq = eq_ref[...]                        # (L, 1)   f32  mask (per bg patch)
    rawT = rawT_ref[0]                      # (C*16,L) bf16 raw 4x4 bg patches^T

    b2 = _diag_fuse(c1)

    # mask, scaled softmax over the background-patch (row) axis, mask again
    s = (b2 * eq) * scale
    s = s - jnp.max(s, axis=0, keepdims=True)
    e = jnp.exp(s)
    inv_den = pl.reciprocal(jnp.sum(e, axis=0, keepdims=True), approx=True)
    attn = (e * inv_den) * eq

    # per-column argmax (first occurrence), kept in-kernel so the full (L, L)
    # attention map never round-trips HBM.
    rows = jax.lax.broadcasted_iota(jnp.int32, attn.shape, 0).astype(jnp.float32)
    mx = jnp.max(attn, axis=0, keepdims=True)
    first = jnp.min(jnp.where(attn == mx, rows, float(attn.shape[0])),
                    axis=0, keepdims=True)
    off_ref[0] = first.astype(jnp.int32)

    # conv_transpose2d matmul part: weighted sum of raw 4x4 patches
    pT_ref[0] = jnp.dot(rawT, attn.astype(jnp.bfloat16),
                        preferred_element_type=jnp.float32)


# ---------------------------------------------------------------------------
# Pallas kernel C: 3x3 conv (via im2col) + bias + ELU, lane-dense + row tiled.
# Computes (Cout, N_tile) so the 128-lane axis carries the large spatial axis.
# ---------------------------------------------------------------------------
def _matmul_bias_elu_kernel(w_ref, xT_ref, b_ref, o_ref):
    acc = jnp.dot(w_ref[...], xT_ref[...], preferred_element_type=jnp.float32)
    acc = acc + b_ref[...]
    o_ref[...] = jnp.where(acc > 0, acc, jnp.exp(acc) - 1.0)   # ELU(alpha=1)


def conv3x3_elu(x, w, b, tile_n=1024):
    """x: (B, Cin, H, W); w: (Cout, Cin, 3, 3); b: (Cout,)."""
    B, Cin, H, W = x.shape
    Cout = w.shape[0]
    K = Cin * 9
    N = B * H * W
    colsT = extract_patches(x, size=3, step=1).reshape(N, K).T      # (K, N)
    tile = min(tile_n, _round_up(N, 128))
    Npad = _round_up(N, tile)
    if Npad != N:
        colsT = jnp.pad(colsT, ((0, 0), (0, Npad - N)))
    wmat = w.reshape(Cout, K)
    bcol = b.reshape(Cout, 1)
    outT = pl.pallas_call(
        _matmul_bias_elu_kernel,
        out_shape=jax.ShapeDtypeStruct((Cout, Npad), jnp.float32),
        grid=(Npad // tile,),
        in_specs=[
            pl.BlockSpec((Cout, K), lambda i: (0, 0)),
            pl.BlockSpec((K, tile), lambda i: (0, i)),
            pl.BlockSpec((Cout, 1), lambda i: (0, 0)),
        ],
        out_specs=pl.BlockSpec((Cout, tile), lambda i: (0, i)),
        compiler_params=pltpu.CompilerParams(dimension_semantics=("parallel",)),
        cost_estimate=pl.CostEstimate(
            flops=2 * Cout * K * Npad,
            transcendentals=Cout * Npad,
            bytes_accessed=4 * (K * Npad + Cout * K + Cout * Npad)),
    )(wmat, colsT, bcol)
    out = outT[:, :N]                                               # (Cout, N)
    return out.reshape(Cout, B, H, W).transpose(1, 0, 2, 3)


# ---------------------------------------------------------------------------
# Full forward of ContextualAttentionModule (rate=2, kernel=3, fuse=True)
# ---------------------------------------------------------------------------
def contextual_attention_forward(foreground, background, params, mask=None,
                                 kernel_size=3, softmax_scale=10.0, rate=2):
    foreground = foreground.astype(jnp.float32)
    background = background.astype(jnp.float32)
    B, C, H, W = foreground.shape
    ksz = 2 * rate

    raw_patches = extract_patches(background, size=ksz, step=rate)   # (B, L, C, 4, 4)
    f = nearest_downsample(foreground, rate)
    bg = nearest_downsample(background, rate)
    _, _, Hf, Wf = f.shape
    _, _, Hb, Wb = bg.shape
    L = Hb * Wb
    assert Hf * Wf == L, "reference views require matching fg/bg patch counts"

    patches = extract_patches(bg, size=kernel_size, step=1)          # (B, L, C, 3, 3)

    if mask is None:
        mask_ds = jnp.zeros((1, 1, Hb, Wb), jnp.float32)
    else:
        mask_ds = nearest_downsample(mask.astype(jnp.float32), rate)
    pmask = extract_patches(mask_ds, size=kernel_size, step=1)       # (1, L, 1, 3, 3)
    pmask = pmask.reshape(1, 1, -1, kernel_size, kernel_size)[0]     # (1, L, 3, 3)
    pmask = jnp.mean(pmask, axis=(2, 3), keepdims=True)
    eq_vec = (pmask == 0.0).astype(jnp.float32).reshape(L, 1)

    C9 = C * kernel_size * kernel_size
    C16 = C * ksz * ksz

    # MXU operands down-cast to bf16 (accumulation stays f32 in-kernel);
    # wcols stays f32 because the L2-normalization is done in f32.
    fcolsT = extract_patches(f, size=kernel_size, step=1) \
        .reshape(B, L, C9).transpose(0, 2, 1).astype(jnp.bfloat16)   # (B, C*9, L)
    wcols = patches.reshape(B, L, C9)                                # (B, L, C*9)
    rawT = raw_patches.reshape(B, L, C16).transpose(0, 2, 1) \
        .astype(jnp.bfloat16)                                        # (B, C*16, L)

    # TODO(synk): for very large feature maps (L >~ 2048) the (L, L) working set
    # should additionally be column-tiled (and vmem_limit_bytes raised); at the
    # sizes this module is used with the per-batch block fits scoped VMEM.

    # ---- kernel A: normalize + correlation matmul + fuse #1 ----------------
    b1 = pl.pallas_call(
        _score_fuse_kernel,
        out_shape=jax.ShapeDtypeStruct((B, L, L), jnp.float32),
        grid=(B,),
        in_specs=[
            pl.BlockSpec((1, L, C9), lambda i: (i, 0, 0)),
            pl.BlockSpec((1, C9, L), lambda i: (i, 0, 0)),
        ],
        out_specs=pl.BlockSpec((1, L, L), lambda i: (i, 0, 0)),
        compiler_params=pltpu.CompilerParams(dimension_semantics=("parallel",)),
        cost_estimate=pl.CostEstimate(
            flops=2 * B * L * L * C9 + 4 * B * L * L,
            transcendentals=2 * B * L,
            bytes_accessed=B * (4 * L * C9 + 2 * C9 * L + 4 * L * L)),
    )(wcols, fcolsT)

    # reference's view(1,Hf,Wf,Hb,Wb).permute(0,2,1,4,3).view(1,1,L,L):
    # pure index transpose of both L axes, done wrapper-side (cheap XLA
    # transpose) instead of two dense LxL permutation matmuls.
    c1 = b1.reshape(B, Hf, Wf, Hb, Wb).transpose(0, 2, 1, 4, 3).reshape(B, L, L)

    # ---- kernel B: fuse #2 + masked softmax + argmax + aggregation ---------
    kern_b = functools.partial(_fuse_softmax_agg_kernel, scale=softmax_scale)
    pT, off = pl.pallas_call(
        kern_b,
        out_shape=(jax.ShapeDtypeStruct((B, C16, L), jnp.float32),
                   jax.ShapeDtypeStruct((B, 1, L), jnp.int32)),
        grid=(B,),
        in_specs=[
            pl.BlockSpec((1, L, L), lambda i: (i, 0, 0)),
            pl.BlockSpec((L, 1), lambda i: (0, 0)),
            pl.BlockSpec((1, C16, L), lambda i: (i, 0, 0)),
        ],
        out_specs=(
            pl.BlockSpec((1, C16, L), lambda i: (i, 0, 0)),
            pl.BlockSpec((1, 1, L), lambda i: (i, 0, 0)),
        ),
        compiler_params=pltpu.CompilerParams(dimension_semantics=("parallel",)),
        cost_estimate=pl.CostEstimate(
            flops=2 * B * C16 * L * L + 12 * B * L * L,
            transcendentals=B * L * L,
            bytes_accessed=B * (4 * L * L + 2 * C16 * L + 4 * C16 * L + 4 * L)),
    )(c1, eq_vec, rawT)

    # F.conv_transpose2d(attn, raw_patches, stride=rate, padding=1) / 4.0
    # (matmul done in-kernel above; overlap-add scatter done here)
    P = pT.reshape(B, C, ksz, ksz, Hf, Wf)
    Hfull = (Hf - 1) * rate + ksz
    Wfull = (Wf - 1) * rate + ksz
    y_full = jnp.zeros((B, C, Hfull, Wfull), jnp.float32)
    for kh in range(ksz):
        for kw in range(ksz):
            y_full = y_full.at[:, :, kh:kh + (Hf - 1) * rate + 1:rate,
                               kw:kw + (Wf - 1) * rate + 1:rate].add(P[:, :, kh, kw])
    y = y_full[:, :, 1:Hfull - 1, 1:Wfull - 1] / 4.0                 # (B, C, H, W)

    # offsets (feed flow visualization). NOTE: the reference computes the
    # second channel as `off // Wf - division` (identically zero, a bug in the
    # original repo); the intended decomposition row = off // Wf, col = off % Wf
    # is used here.
    off = off.reshape(B, Hf, Wf)
    offsets = jnp.stack([off // Wf, off % Wf], axis=1)               # (B, 2, Hf, Wf)
    h_add = jnp.broadcast_to(jnp.arange(Hb).reshape(1, 1, Hb, 1), (B, 1, Hb, Wb))
    w_add = jnp.broadcast_to(jnp.arange(Wb).reshape(1, 1, 1, Wb), (B, 1, Hb, Wb))
    offsets = offsets - jnp.concatenate([h_add, w_add], axis=1)
    # TODO(synk): flow_to_image() colour-wheel visualization + nearest upsample of
    # the RGB flow image is an external numpy utility with no Pallas equivalent;
    # the raw offset field is returned instead.

    # self.model(y): Conv2d(3x3, pad 1) + ELU, twice (Pallas matmul kernels)
    out = conv3x3_elu(y, params["w1"], params["b1"])
    out = conv3x3_elu(out, params["w2"], params["b2"])
    return out, offsets


def init_params(key, in_ch, out_ch):
    k1, k2, k3, k4 = jax.random.split(key, 4)
    s = 0.1
    return {
        "w1": s * jax.random.normal(k1, (out_ch, in_ch, 3, 3), jnp.float32),
        "b1": s * jax.random.normal(k2, (out_ch,), jnp.float32),
        "w2": s * jax.random.normal(k3, (out_ch, out_ch, 3, 3), jnp.float32),
        "b2": s * jax.random.normal(k4, (out_ch,), jnp.float32),
    }


if __name__ == "__main__":
    key = jax.random.PRNGKey(0)
    kf, kb, kp = jax.random.split(key, 3)
    B, C, H, W = 2, 4, 16, 16
    foreground = jax.random.normal(kf, (B, C, H, W), jnp.float32)
    background = jax.random.normal(kb, (B, C, H, W), jnp.float32)
    params = init_params(kp, C, C)

    out, offsets = contextual_attention_forward(foreground, background, params)
    out = jax.block_until_ready(out)
    offsets = jax.block_until_ready(offsets)

    assert out.shape == (B, C, H, W)
    assert offsets.shape == (B, 2, H // 2, W // 2)
    assert bool(jnp.all(jnp.isfinite(out)))
    print("KERNEL_OK")
</pallas_src>

<mosaic_0001>
module attributes {stable_mosaic.version = 11 : i64} {
  func.func @_score_fuse_kernel(%arg0: i32, %arg1: memref<1x64x36xf32, #tpu.memory_space<vmem>>, %arg2: memref<1x36x64xbf16, #tpu.memory_space<vmem>>, %arg3: memref<1x64x64xf32, #tpu.memory_space<vmem>>) attributes {dimension_semantics = [#tpu.dimension_semantics<parallel>], iteration_bounds = array<i64: 2>, scalar_prefetch = 0 : i64, scratch_operands = 0 : i64, tpu.core_type = #tpu.core_type<tc>, window_params = [{transform_indices = @transform_0, window_bounds = array<i64: 1, 64, 36>}, {transform_indices = @transform_1, window_bounds = array<i64: 1, 36, 64>}, {transform_indices = @transform_2, window_bounds = array<i64: 1, 64, 64>}]} {
    %c0 = arith.constant 0 : index
    %c0_0 = arith.constant 0 : index
    %c0_1 = arith.constant 0 : index
    %0 = vector.load %arg1[%c0, %c0_0, %c0_1] : memref<1x64x36xf32, #tpu.memory_space<vmem>>, vector<1x64x36xf32>
    %1 = vector.shape_cast %0 : vector<1x64x36xf32> to vector<64x36xf32>
    %c0_2 = arith.constant 0 : index
    %c0_3 = arith.constant 0 : index
    %c0_4 = arith.constant 0 : index
    %2 = vector.load %arg2[%c0_2, %c0_3, %c0_4] : memref<1x36x64xbf16, #tpu.memory_space<vmem>>, vector<1x36x64xbf16>
    %3 = vector.shape_cast %2 : vector<1x36x64xbf16> to vector<36x64xbf16>
    %4 = arith.mulf %1, %1 : vector<64x36xf32>
    %cst = arith.constant dense<0.000000e+00> : vector<64xf32>
    %5 = vector.multi_reduction <add>, %4, %cst [1] : vector<64x36xf32> to vector<64xf32>
    %6 = vector.shape_cast %5 : vector<64xf32> to vector<64x1xf32>
    %7 = math.sqrt %6 : vector<64x1xf32>
    %cst_5 = arith.constant 9.99999974E-5 : f32
    %8 = vector.broadcast %cst_5 : f32 to vector<64x1xf32>
    %9 = arith.maximumf %7, %8 : vector<64x1xf32>
    %10 = tpu.reciprocal %9 {approx = true} : vector<64x1xf32> -> vector<64x1xf32>
    %11 = vector.broadcast %10 : vector<64x1xf32> to vector<64x36xf32>
    %12 = arith.mulf %1, %11 : vector<64x36xf32>
    %13 = arith.truncf %12 : vector<64x36xf32> to vector<64x36xbf16>
    %cst_6 = arith.constant dense<0.000000e+00> : vector<64x64xf32>
    %14 = tpu.matmul %13, %3, %cst_6 {dimension_numbers = #tpu.dot_dimension_numbers<[1], [0], [0], [1], [0, 0, 1, 1], [], []>} : vector<64x36xbf16>, vector<36x64xbf16>, vector<64x64xf32> -> vector<64x64xf32>
    %15 = tpu.iota {dimensions = array<i32: 0>} : vector<64x64xi32>
    %16 = tpu.iota {dimensions = array<i32: 1>} : vector<64x64xi32>
    %c1_i32 = arith.constant 1 : i32
    %17 = tpu.dynamic_rotate %14 by %c1_i32 dim 1 : vector<64x64xf32>, i32 -> vector<64x64xf32>
    %c1_i32_7 = arith.constant 1 : i32
    %18 = tpu.dynamic_rotate %17 by %c1_i32_7 dim 0 : vector<64x64xf32>, i32 -> vector<64x64xf32>
    %c0_i32 = arith.constant 0 : i32
    %19 = vector.broadcast %c0_i32 : i32 to vector<64x64xi32>
    %20 = arith.cmpi eq, %15, %19 : vector<64x64xi32>
    %c0_i32_8 = arith.constant 0 : i32
    %21 = vector.broadcast %c0_i32_8 : i32 to vector<64x64xi32>
    %22 = arith.cmpi eq, %16, %21 : vector<64x64xi32>
    %23 = arith.ori %20, %22 : vector<64x64xi1>
    %cst_9 = arith.constant 0.000000e+00 : f32
    %24 = vector.broadcast %cst_9 : f32 to vector<64x64xf32>
    %25 = arith.select %23, %24, %18 : vector<64x64xi1>, vector<64x64xf32>
    %c63_i32 = arith.constant 63 : i32
    %26 = tpu.dynamic_rotate %14 by %c63_i32 dim 1 : vector<64x64xf32>, i32 -> vector<64x64xf32>
    %c63_i32_10 = arith.constant 63 : i32
    %27 = tpu.dynamic_rotate %26 by %c63_i32_10 dim 0 : vector<64x64xf32>, i32 -> vector<64x64xf32>
    %c63_i32_11 = arith.constant 63 : i32
    %28 = vector.broadcast %c63_i32_11 : i32 to vector<64x64xi32>
    %29 = arith.cmpi eq, %15, %28 : vector<64x64xi32>
    %c63_i32_12 = arith.constant 63 : i32
    %30 = vector.broadcast %c63_i32_12 : i32 to vector<64x64xi32>
    %31 = arith.cmpi eq, %16, %30 : vector<64x64xi32>
    %32 = arith.ori %29, %31 : vector<64x64xi1>
    %cst_13 = arith.constant 0.000000e+00 : f32
    %33 = vector.broadcast %cst_13 : f32 to vector<64x64xf32>
    %34 = arith.select %32, %33, %27 : vector<64x64xi1>, vector<64x64xf32>
    %35 = arith.addf %14, %25 : vector<64x64xf32>
    %36 = arith.addf %35, %34 : vector<64x64xf32>
    %c0_14 = arith.constant 0 : index
    %c0_15 = arith.constant 0 : index
    %c0_16 = arith.constant 0 : index
    %37 = vector.load %arg3[%c0_14, %c0_15, %c0_16] : memref<1x64x64xf32, #tpu.memory_space<vmem>>, vector<1x64x64xf32>
    %38 = vector.shape_cast %37 : vector<1x64x64xf32> to vector<64x64xf32>
    %39 = vector.shape_cast %36 : vector<64x64xf32> to vector<1x64x64xf32>
    tpu.vector_store %arg3[%c0_14, %c0_15, %c0_16], %39 {strides = array<i32>} : memref<1x64x64xf32, #tpu.memory_space<vmem>>, vector<1x64x64xf32>,
    return
  }
  func.func @transform_0(%arg0: i32) -> (i32, i32, i32) {
    %c0_i32 = arith.constant 0 : i32
    %c0_i32_0 = arith.constant 0 : i32
    %c0_i32_1 = arith.constant 0 : i32
    return %arg0, %c0_i32, %c0_i32_0 : i32, i32, i32
  }
  func.func @transform_1(%arg0: i32) -> (i32, i32, i32) {
    %c0_i32 = arith.constant 0 : i32
    %c0_i32_0 = arith.constant 0 : i32
    %c0_i32_1 = arith.constant 0 : i32
    return %arg0, %c0_i32, %c0_i32_0 : i32, i32, i32
  }
  func.func @transform_2(%arg0: i32) -> (i32, i32, i32) {
    %c0_i32 = arith.constant 0 : i32
    %c0_i32_0 = arith.constant 0 : i32
    %c0_i32_1 = arith.constant 0 : i32
    return %arg0, %c0_i32, %c0_i32_0 : i32, i32, i32
  }
}

</mosaic_0001>

<llo_original>
// kernel: tpu_custom_call.1
$region0: #{tpu_custom_call.1}
  #allocation0 [shape = 'u32[]', space=smem, size = 0x4, offset = 0x4, fixed_abs, tag = 'smem constant byte address 0x4 - core index']
  #allocation1 [shape = 'u32[144,128]{1,0:T(1,128)}', space=vmem, size = 0x12000, scoped, tag = 'internal scratch']
  %s0 = inlined_call_operand.vmem [shape: f32[2,64,36], index: 0, kind: input, shape index: {}]
  %s1 = inlined_call_operand.vmem [shape: bf16[2,36,64], index: 1, kind: input, shape index: {}]
  %s2 = inlined_call_operand.hbm [shape: f32[2,64,64], index: 2, kind: output, shape index: {}]
  %s3 = sld [smem:[#allocation0]]
  $region41: #{tpu_custom_call.1} parent=0
    _
  %s5 = ssub.s32 1, %s3
  %s6 = scalar_select 0, %s5, %s3
  $region1: #{tpu_custom_call.1} parent=0
    #allocation2 [shape = 'u8[65536]{0}', space=vmem, size = 0x10000, scoped, tag = 'output window, operand 0']
    #allocation3 [shape = 's32[2]{0}', space=sflag, size = 0x8, scoped, tag = 'scoped memory for tpu_custom_call.1']
    %7 = vsyncpa [#allocation3], 0
    %s8 = scalar_lea.sflag [#allocation3], 1
    %9 = vsyncpa %s8, 0
    loop: start=0, step=1, limit=4
    $region2: #{tpu_custom_call.1} parent=1 // loop_pre_header
      _
    $region3: #{tpu_custom_call.1} parent=1 // loop_header
      %s11 = sphi 0, %s15
      %p12 = scmp.ge.s32.totalorder %s11, 4
      %s21 = sphi 0, %s23
      %s24 = sphi 0, %s21
      %s25 = sphi 0, %s24
      %s41 = sphi 0, %s25
      %s47 = sphi 0, %s49
      %s50 = sphi 0, %s47
      %s51 = sphi 0, %s50
      %s67 = sphi 0, %s51
      %s73 = sphi 0, %s75
      %s76 = sphi 0, %s73
      %s77 = sphi 0, %s76
      %s93 = sphi 0, %s77
    $region4: #{tpu_custom_call.1} parent=1 // loop_header_branch
      %14 = sbr.rel (%p12) target = $region8
    $region5: #{tpu_custom_call.1} parent=1 // loop_body
      %s16 = ssub.s32 %s11, 1
      %s17 = ssub.s32 %s11, 2
      %s18 = sadd.s32 %s11, 1
      %s19 = ssub.s32 %s11, %s18
      %p20 = scmp.eq.s32.totalorder %s19, 0
      %s22 = sadd.s32 %s21, 1
      %s23 = scalar_select %p20, %s21, %s22
      %p26 = pneg %p20
      %p27 = scmp.eq.s32.totalorder %s11, 1
      %p28 = por %p26, %p27
      %p29 = scmp.ne.s32.totalorder %s21, %s24
      %p30 = scmp.eq.s32.totalorder %s11, 0
      %p31 = por %p29, %p30
      %p32 = scmp.ne.s32.totalorder %s21, %s24
      %p33 = scmp.eq.s32.totalorder %s16, 1
      %p34 = por %p32, %p33
      %p35 = scmp.ne.s32.totalorder %s24, %s25
      %p36 = scmp.eq.s32.totalorder %s16, 0
      %p37 = por %p35, %p36
      %p38 = scmp.ne.s32.totalorder %s24, %s25
      %p39 = scmp.eq.s32.totalorder %s17, 1
      %p40 = por %p38, %p39
      %p42 = scmp.ne.s32.totalorder %s25, %s41
      %p43 = scmp.eq.s32.totalorder %s17, 0
      %p44 = por %p42, %p43
      %s45 = ssub.s32 %s11, %s18
      %p46 = scmp.eq.s32.totalorder %s45, 0
      %s48 = sadd.s32 %s47, 1
      %s49 = scalar_select %p46, %s47, %s48
      %p52 = pneg %p46
      %p53 = scmp.eq.s32.totalorder %s11, 1
      %p54 = por %p52, %p53
      %p55 = scmp.ne.s32.totalorder %s47, %s50
      %p56 = scmp.eq.s32.totalorder %s11, 0
      %p57 = por %p55, %p56
      %p58 = scmp.ne.s32.totalorder %s47, %s50
      %p59 = scmp.eq.s32.totalorder %s16, 1
      %p60 = por %p58, %p59
      %p61 = scmp.ne.s32.totalorder %s50, %s51
      %p62 = scmp.eq.s32.totalorder %s16, 0
      %p63 = por %p61, %p62
      %p64 = scmp.ne.s32.totalorder %s50, %s51
      %p65 = scmp.eq.s32.totalorder %s17, 1
      %p66 = por %p64, %p65
      %p68 = scmp.ne.s32.totalorder %s51, %s67
      %p69 = scmp.eq.s32.totalorder %s17, 0
      %p70 = por %p68, %p69
      %s71 = ssub.s32 %s11, %s18
      %p72 = scmp.eq.s32.totalorder %s71, 0
      %s74 = sadd.s32 %s73, 1
      %s75 = scalar_select %p72, %s73, %s74
      %p78 = pneg %p72
      %p79 = scmp.eq.s32.totalorder %s11, 1
      %p80 = por %p78, %p79
      %p81 = scmp.ne.s32.totalorder %s73, %s76
      %p82 = scmp.eq.s32.totalorder %s11, 0
      %p83 = por %p81, %p82
      %p84 = scmp.ne.s32.totalorder %s73, %s76
      %p85 = scmp.eq.s32.totalorder %s16, 1
      %p86 = por %p84, %p85
      %p87 = scmp.ne.s32.totalorder %s76, %s77
      %p88 = scmp.eq.s32.totalorder %s16, 0
      %p89 = por %p87, %p88
      %p90 = scmp.ne.s32.totalorder %s76, %s77
      %p91 = scmp.eq.s32.totalorder %s17, 1
      %p92 = por %p90, %p91
      %p94 = scmp.ne.s32.totalorder %s77, %s93
      %p95 = scmp.eq.s32.totalorder %s17, 0
      %p96 = por %p94, %p95
      %p97 = scmp.le.s32.totalorder 1, %s11
      %p98 = scmp.lt.s32.totalorder %s11, 3
      %p99 = pnand %p97, %p98
      %p100 = pneg %p99
      // Predicated region
      $region9: #{tpu_custom_call.1} parent=5 // pred_check
        _
      $region10: #{tpu_custom_call.1} parent=5 // pred_check_branch
        %102 = sbr.rel (%p99) target = $region12
      $region11: #{tpu_custom_call.1} parent=5 // pred_region
        %s103 = ssub.s32 %s11, 1
      $region12: #{tpu_custom_call.1} parent=5 // pred_fallthru
        _
      %p104 = scmp.lt.s32.totalorder %s11, 2
      // Predicated region
      $region13: #{tpu_custom_call.1} parent=5 // pred_check
        %p105 = pneg %p104
      $region14: #{tpu_custom_call.1} parent=5 // pred_check_branch
        %107 = sbr.rel (%p105) target = $region16
      $region15: #{tpu_custom_call.1} parent=5 // pred_region
        // Predicated region
        $region17: #{tpu_custom_call.1} parent=15 // pred_check
          %p108 = pneg %p31
        $region18: #{tpu_custom_call.1} parent=15 // pred_check_branch
          %110 = sbr.rel (%p108) target = $region20
        $region19: #{tpu_custom_call.1} parent=15 // pred_region
          %p111 = scmp.lt.s32.totalorder %s11, 1
          %s112 = scalar_select %p111, %s11, 1
          %s113 = smul.addr %s112, 8
          %s114 = smul.addr %s113, 8
          %s115 = scalar_lea.vmem %s0, %s114
        $region20: #{tpu_custom_call.1} parent=15 // pred_fallthru
          _
        // Predicated region
        $region21: #{tpu_custom_call.1} parent=15 // pred_check
          %p116 = pneg %p57
        $region22: #{tpu_custom_call.1} parent=15 // pred_check_branch
          %118 = sbr.rel (%p116) target = $region24
        $region23: #{tpu_custom_call.1} parent=15 // pred_region
          %p119 = scmp.lt.s32.totalorder %s11, 1
          %s120 = scalar_select %p119, %s11, 1
          %s121 = smul.addr %s120, 5
          %s122 = smul.addr %s121, 4
          %s123 = scalar_lea.vmem %s1, %s122
        $region24: #{tpu_custom_call.1} parent=15 // pred_fallthru
          _
      $region16: #{tpu_custom_call.1} parent=5 // pred_fallthru
        _
      %p124 = scmp.le.s32.totalorder 1, %s11
      %p125 = scmp.lt.s32.totalorder %s11, 3
      %p126 = pnand %p124, %p125
      %p127 = pneg %p126
      // Predicated region
      $region25: #{tpu_custom_call.1} parent=5 // pred_check
        _
      $region26: #{tpu_custom_call.1} parent=5 // pred_check_branch
        %129 = sbr.rel (%p126) target = $region28
      $region27: #{tpu_custom_call.1} parent=5 // pred_region
        %s130 = ssub.s32 %s11, 1
        %p131 = scmp.lt.s32.totalorder %s16, 1
        %s132 = scalar_select %p131, %s16, 1
        %s133 = smul.addr %s132, 8
        %s134 = smul.addr %s133, 8
        %s135 = scalar_lea.vmem %s0, %s134
        %p136 = pneg %p37
        %p137 = pneg %p34
        %p138 = scmp.lt.s32.totalorder %s16, 1
        %s139 = scalar_select %p138, %s16, 1
        %s140 = smul.addr %s139, 5
        %s141 = smul.addr %s140, 4
        %s142 = scalar_lea.vmem %s1, %s141
        %p143 = pneg %p63
        %p144 = pneg %p60
        %p145 = pneg %p89
        %p146 = pneg %p86
        %s147 = sand.u32 %s76, 1
        %s148 = scalar_lea.sflag [#allocation3], %s147
        %s149 = sand.u32 %s76, 1
        %s150 = smul.addr %s149, 64
        %s151 = scalar_lea.vmem [#allocation2], %s150
        %p152 = scmp.lt.s32.totalorder %s16, 1
        %s153 = scalar_select %p152, %s16, 1
        %s154 = smul.addr %s153, 8
        %s155 = smul.addr %s154, 8
        %s156 = scalar_lea.vmem %s0, %s155
        %p157 = scmp.lt.s32.totalorder %s16, 1
        %s158 = scalar_select %p157, %s16, 1
        %s159 = smul.addr %s158, 5
        %s160 = smul.addr %s159, 4
        %s161 = scalar_lea.vmem %s1, %s160
        %v163 = vld [vmem:[%s156] sm:$0xff]
        %v164 = vld [vmem:[%s156 + $0x8] sm:$0xff]
        %v165 = vld [vmem:[%s156 + $0x10] sm:$0xff]
        %v166 = vld [vmem:[%s156 + $0x18] sm:$0xff]
        %v167 = vld [vmem:[%s156 + $0x20] sm:$0xff]
        %v168 = vld [vmem:[%s156 + $0x28] sm:$0xff]
        %v169 = vld [vmem:[%s156 + $0x30] sm:$0xff]
        %v170 = vld [vmem:[%s156 + $0x38] sm:$0xff]
        %v171 = vld [vmem:[%s161] sm:$0xf]
        %v172 = vld [vmem:[%s161 + $0x4] sm:$0xf]
        %v173 = vld [vmem:[%s161 + $0x8] sm:$0xf]
        %v174 = vld [vmem:[%s161 + $0xc] sm:$0xf]
        %v175 = vld [vmem:[%s161 + $0x10] sm:$0x3]
        %v176 = vmul.f32 %v163, %v163
        %v177 = vmul.f32 %v164, %v164
        %v178 = vmul.f32 %v165, %v165
        %v179 = vmul.f32 %v166, %v166
        %v180 = vmul.f32 %v167, %v167
        %v181 = vmul.f32 %v168, %v168
        %v182 = vmul.f32 %v169, %v169
        %v183 = vmul.f32 %v170, %v170
        %vm184 = vcmask 293888
        %v185 = vsel %vm184, %v176, 0.0
        %186 = vadd.xlane.f32.xlu0 %v185
        %v187 = vpop.xlane.xlu0 %186
        %v188 = vsel %vm184, %v177, 0.0
        %189 = vadd.xlane.f32.xlu0 %v188
        %v190 = vpop.xlane.xlu0 %189
        %v191 = vsel %vm184, %v178, 0.0
        %192 = vadd.xlane.f32.xlu0 %v191
        %v193 = vpop.xlane.xlu0 %192
        %v194 = vsel %vm184, %v179, 0.0
        %195 = vadd.xlane.f32.xlu0 %v194
        %v196 = vpop.xlane.xlu0 %195
        %v197 = vsel %vm184, %v180, 0.0
        %198 = vadd.xlane.f32.xlu0 %v197
        %v199 = vpop.xlane.xlu0 %198
        %v200 = vsel %vm184, %v181, 0.0
        %201 = vadd.xlane.f32.xlu0 %v200
        %v202 = vpop.xlane.xlu0 %201
        %v203 = vsel %vm184, %v182, 0.0
        %204 = vadd.xlane.f32.xlu0 %v203
        %v205 = vpop.xlane.xlu0 %204
        %v206 = vsel %vm184, %v183, 0.0
        %207 = vadd.xlane.f32.xlu0 %v206
        %v208 = vpop.xlane.xlu0 %207
        %v209 = vrsqrt.pop %v187
        %v210 = vmul.f32 %v187, %v209
        %vm211 = vcmp.eq.f32.partialorder %v187, inf
        %v212 = vsel %vm211, %v187, %v210
        %vm213 = vcmp.eq.f32.partialorder %v187, 0.0
        %v214 = vand.u32 %v187, 2147483648
        %v215 = vsel %vm213, %v214, %v212
        %v216 = vrsqrt.pop %v190
        %v217 = vmul.f32 %v190, %v216
        %vm218 = vcmp.eq.f32.partialorder %v190, inf
        %v219 = vsel %vm218, %v190, %v217
        %vm220 = vcmp.eq.f32.partialorder %v190, 0.0
        %v221 = vand.u32 %v190, 2147483648
        %v222 = vsel %vm220, %v221, %v219
        %v223 = vrsqrt.pop %v193
        %v224 = vmul.f32 %v193, %v223
        %vm225 = vcmp.eq.f32.partialorder %v193, inf
        %v226 = vsel %vm225, %v193, %v224
        %vm227 = vcmp.eq.f32.partialorder %v193, 0.0
        %v228 = vand.u32 %v193, 2147483648
        %v229 = vsel %vm227, %v228, %v226
        %v230 = vrsqrt.pop %v196
        %v231 = vmul.f32 %v196, %v230
        %vm232 = vcmp.eq.f32.partialorder %v196, inf
        %v233 = vsel %vm232, %v196, %v231
        %vm234 = vcmp.eq.f32.partialorder %v196, 0.0
        %v235 = vand.u32 %v196, 2147483648
        %v236 = vsel %vm234, %v235, %v233
        %v237 = vrsqrt.pop %v199
        %v238 = vmul.f32 %v199, %v237
        %vm239 = vcmp.eq.f32.partialorder %v199, inf
        %v240 = vsel %vm239, %v199, %v238
        %vm241 = vcmp.eq.f32.partialorder %v199, 0.0
        %v242 = vand.u32 %v199, 2147483648
        %v243 = vsel %vm241, %v242, %v240
        %v244 = vrsqrt.pop %v202
        %v245 = vmul.f32 %v202, %v244
        %vm246 = vcmp.eq.f32.partialorder %v202, inf
        %v247 = vsel %vm246, %v202, %v245
        %vm248 = vcmp.eq.f32.partialorder %v202, 0.0
        %v249 = vand.u32 %v202, 2147483648
        %v250 = vsel %vm248, %v249, %v247
        %v251 = vrsqrt.pop %v205
        %v252 = vmul.f32 %v205, %v251
        %vm253 = vcmp.eq.f32.partialorder %v205, inf
        %v254 = vsel %vm253, %v205, %v252
        %vm255 = vcmp.eq.f32.partialorder %v205, 0.0
        %v256 = vand.u32 %v205, 2147483648
        %v257 = vsel %vm255, %v256, %v254
        %v258 = vrsqrt.pop %v208
        %v259 = vmul.f32 %v208, %v258
        %vm260 = vcmp.eq.f32.partialorder %v208, inf
        %v261 = vsel %vm260, %v208, %v259
        %vm262 = vcmp.eq.f32.partialorder %v208, 0.0
        %v263 = vand.u32 %v208, 2147483648
        %v264 = vsel %vm262, %v263, %v261
        %v265 = vmax.f32 %v215, 0.0001
        %v266 = vmax.f32 %v222, 0.0001
        %v267 = vmax.f32 %v229, 0.0001
        %v268 = vmax.f32 %v236, 0.0001
        %v269 = vmax.f32 %v243, 0.0001
        %v270 = vmax.f32 %v250, 0.0001
        %v271 = vmax.f32 %v257, 0.0001
        %v272 = vmax.f32 %v264, 0.0001
        %v273 = vrcp.pop %v265
        %v274 = vrcp.pop %v266
        %v275 = vrcp.pop %v267
        %v276 = vrcp.pop %v268
        %v277 = vrcp.pop %v269
        %v278 = vrcp.pop %v270
        %v279 = vrcp.pop %v271
        %v280 = vrcp.pop %v272
        %v281 = vmul.f32 %v163, %v273
        %v282 = vmul.f32 %v164, %v274
        %v283 = vmul.f32 %v165, %v275
        %v284 = vmul.f32 %v166, %v276
        %v285 = vmul.f32 %v167, %v277
        %v286 = vmul.f32 %v168, %v278
        %v287 = vmul.f32 %v169, %v279
        %v288 = vmul.f32 %v170, %v280
        %v289 = vpack.c.bf16 %v282, %v281
        %v290 = vpack.c.bf16 %v284, %v283
        %v291 = vpack.c.bf16 %v286, %v285
        %v292 = vpack.c.bf16 %v288, %v287
        %v298 = vunpack.c.l.b16 %v171
        %v299 = vunpack.c.l.b16 %v172
        %v300 = vunpack.c.l.b16 %v173
        %v301 = vunpack.c.l.b16 %v174
        %v302 = vunpack.c.l.b16 %v175
        %v303 = vpack.c.b16 %v299, %v298
        %v304 = vpack.c.b16 %v301, %v300
        %v305 = vpack.c.b16 %v302, %v302
        %v309 = vsel %vm184, %v289, 0
        %v312 = vsel %vm184, %v290, 0
        %v315 = vsel %vm184, %v291, 0
        %v318 = vsel %vm184, %v292, 0
        %vm320 = vcmask 1041408
        %v322 = vsel %vm320, %v305, 0
        %324 = vmatprep.subr.bf16.mxu0 0
        %325 = vmatpush1.bf16.msra.mxu0 %v303
        %326 = vmatprep.subr.bf16.mxu0 0
        %327 = vmatpush1.bf16.msra.mxu0 %v304
        %328 = vmatprep.subr.bf16.mxu0 0
        %329 = vmatpush1.bf16.msra.mxu0 %v322
        %330 = vmatprep.subr.bf16.mxu0 0
        %331 = vmatpush1.bf16.msra.mxu0 0
        %332 = vmatprep.subr.bf16.mxu0 0
        %333 = vmatpush1.bf16.msra.mxu0 0
        %334 = vmatprep.subr.bf16.mxu0 0
        %335 = vmatpush1.bf16.msra.mxu0 0
        %336 = vmatprep.subr.bf16.mxu0 0
        %337 = vmatpush1.bf16.msra.mxu0 0
        %338 = vmatprep.subr.bf16.mxu0 0
        %339 = vmatpush1.bf16.msra.mxu0 0
        %340 = vmatprep.subr.bf16.mxu0 0
        %341 = vmatpush1.bf16.msra.mxu0 0
        %342 = vmatprep.subr.bf16.mxu0 0
        %343 = vmatpush1.bf16.msra.mxu0 0
        %344 = vmatprep.subr.bf16.mxu0 0
        %345 = vmatpush1.bf16.msra.mxu0 0
        %346 = vmatprep.subr.bf16.mxu0 0
        %347 = vmatpush1.bf16.msra.mxu0 0
        %348 = vmatprep.subr.bf16.mxu0 0
        %349 = vmatpush1.bf16.msra.mxu0 0
        %350 = vmatprep.subr.bf16.mxu0 0
        %351 = vmatpush1.bf16.msra.mxu0 0
        %352 = vmatprep.subr.bf16.mxu0 0
        %353 = vmatpush1.bf16.msra.mxu0 0
        %354 = vmatprep.subr.bf16.mxu0 0
        %355 = vmatpush1.bf16.msra.mxu0 0
        %356 = vmatprep.mubr.bf16.mxu0 0
        %357 = vmatmul.mubr.bf16.gmra.mrb[0].mxu0 %v309
        %v358 = vpop.f32.mrb[0].mxu0
        %v359 = vadd.f32 0.0, %v358
        %v360 = vpop.f32.mrb[0].mxu0
        %v361 = vpop.f32.mrb[0].mxu0
        %v362 = vadd.f32 0.0, %v361
        %v363 = vpop.f32.mrb[0].mxu0
        %364 = vmatprep.mubr.bf16.mxu0 0
        %365 = vmatmul.mubr.bf16.gmra.mrb[0].mxu0 %v312
        %v366 = vpop.f32.mrb[0].mxu0
        %v367 = vadd.f32 0.0, %v366
        %v368 = vpop.f32.mrb[0].mxu0
        %v369 = vpop.f32.mrb[0].mxu0
        %v370 = vadd.f32 0.0, %v369
        %v371 = vpop.f32.mrb[0].mxu0
        %372 = vmatprep.mubr.bf16.mxu0 0
        %373 = vmatmul.mubr.bf16.gmra.mrb[0].mxu0 %v315
        %v374 = vpop.f32.mrb[0].mxu0
        %v375 = vadd.f32 0.0, %v374
        %v376 = vpop.f32.mrb[0].mxu0
        %v377 = vpop.f32.mrb[0].mxu0
        %v378 = vadd.f32 0.0, %v377
        %v379 = vpop.f32.mrb[0].mxu0
        %380 = vmatprep.mubr.bf16.mxu0 0
        %381 = vmatmul.mubr.bf16.gmra.mrb[0].mxu0 %v318
        %v382 = vpop.f32.mrb[0].mxu0
        %v383 = vadd.f32 0.0, %v382
        %v384 = vpop.f32.mrb[0].mxu0
        %v385 = vpop.f32.mrb[0].mxu0
        %v386 = vadd.f32 0.0, %v385
        %v387 = vpop.f32.mrb[0].mxu0
        %388 = vdwg.mxu0
        %v389 = vlaneseq
        %v390 = vshrl.u32 %v389, 7
        %v391 = vadd.s32 %v390, 8
        %v392 = vadd.s32 %v390, 16
        %v393 = vadd.s32 %v390, 24
        %v394 = vadd.s32 %v390, 32
        %v395 = vadd.s32 %v390, 40
        %v396 = vadd.s32 %v390, 48
        %v397 = vadd.s32 %v390, 56
        %v398 = vlaneseq
        %v399 = vand.u32 %v398, 127
        %vm400 = vcmask 1048064
        %401 = vrot.lane.b32.xlu0 %v359, 64
        %v402 = vpop.permute.xlu0 %401
        %v403 = vsel %vm400, %v402, %v359
        %404 = vrot.lane.b32.xlu0 %v362, 64
        %v405 = vpop.permute.xlu0 %404
        %v406 = vsel %vm400, %v405, %v362
        %407 = vrot.lane.b32.xlu0 %v367, 64
        %v408 = vpop.permute.xlu0 %407
        %v409 = vsel %vm400, %v408, %v367
        %410 = vrot.lane.b32.xlu0 %v370, 64
        %v411 = vpop.permute.xlu0 %410
        %v412 = vsel %vm400, %v411, %v370
        %413 = vrot.lane.b32.xlu0 %v375, 64
        %v414 = vpop.permute.xlu0 %413
        %v415 = vsel %vm400, %v414, %v375
        %416 = vrot.lane.b32.xlu0 %v378, 64
        %v417 = vpop.permute.xlu0 %416
        %v418 = vsel %vm400, %v417, %v378
        %419 = vrot.lane.b32.xlu0 %v383, 64
        %v420 = vpop.permute.xlu0 %419
        %v421 = vsel %vm400, %v420, %v383
        %422 = vrot.lane.b32.xlu0 %v386, 64
        %v423 = vpop.permute.xlu0 %422
        %v424 = vsel %vm400, %v423, %v386
        %425 = vrot.lane.b32.xlu0 %v403, 64
        %v426 = vpop.permute.xlu0 %425
        %427 = vrot.lane.b32.xlu0 %v406, 64
        %v428 = vpop.permute.xlu0 %427
        %429 = vrot.lane.b32.xlu0 %v409, 64
        %v430 = vpop.permute.xlu0 %429
        %431 = vrot.lane.b32.xlu0 %v412, 64
        %v432 = vpop.permute.xlu0 %431
        %433 = vrot.lane.b32.xlu0 %v415, 64
        %v434 = vpop.permute.xlu0 %433
        %435 = vrot.lane.b32.xlu0 %v418, 64
        %v436 = vpop.permute.xlu0 %435
        %437 = vrot.lane.b32.xlu0 %v421, 64
        %v438 = vpop.permute.xlu0 %437
        %439 = vrot.lane.b32.xlu0 %v424, 64
        %v440 = vpop.permute.xlu0 %439
        %v441 = vsel %vm400, %v426, %v359
        %v442 = vsel %vm400, %v428, %v362
        %v443 = vsel %vm400, %v430, %v367
        %v444 = vsel %vm400, %v432, %v370
        %v445 = vsel %vm400, %v434, %v375
        %v446 = vsel %vm400, %v436, %v378
        %v447 = vsel %vm400, %v438, %v383
        %v448 = vsel %vm400, %v440, %v386
        %457 = vrot.lane.b32.xlu0 %v441, 65
        %v458 = vpop.permute.xlu0 %457
        %459 = vrot.lane.b32.xlu0 %v442, 65
        %v460 = vpop.permute.xlu0 %459
        %461 = vrot.lane.b32.xlu0 %v443, 65
        %v462 = vpop.permute.xlu0 %461
        %463 = vrot.lane.b32.xlu0 %v444, 65
        %v464 = vpop.permute.xlu0 %463
        %465 = vrot.lane.b32.xlu0 %v445, 65
        %v466 = vpop.permute.xlu0 %465
        %467 = vrot.lane.b32.xlu0 %v446, 65
        %v468 = vpop.permute.xlu0 %467
        %469 = vrot.lane.b32.xlu0 %v447, 65
        %v470 = vpop.permute.xlu0 %469
        %471 = vrot.lane.b32.xlu0 %v448, 65
        %v472 = vpop.permute.xlu0 %471
        %v481 = vrot.slane %v458, 7
        %v482 = vrot.slane %v460, 7
        %v483 = vrot.slane %v462, 7
        %v484 = vrot.slane %v464, 7
        %v485 = vrot.slane %v466, 7
        %v486 = vrot.slane %v468, 7
        %v487 = vrot.slane %v470, 7
        %v488 = vrot.slane %v472, 7
        %vm489 = vcmp.lt.s32.totalorder %v390, 1
        %v490 = vsel %vm489, %v487, %v488
        %v491 = vsel %vm489, %v486, %v487
        %v492 = vsel %vm489, %v485, %v486
        %v493 = vsel %vm489, %v484, %v485
        %v494 = vsel %vm489, %v483, %v484
        %v495 = vsel %vm489, %v482, %v483
        %v496 = vsel %vm489, %v481, %v482
        %v497 = vsel %vm489, %v488, %v481
        %vm498 = vcmp.eq.s32.totalorder %v390, 0
        %vm499 = vcmp.eq.s32.totalorder %v391, 0
        %vm500 = vcmp.eq.s32.totalorder %v392, 0
        %vm501 = vcmp.eq.s32.totalorder %v393, 0
        %vm502 = vcmp.eq.s32.totalorder %v394, 0
        %vm503 = vcmp.eq.s32.totalorder %v395, 0
        %vm504 = vcmp.eq.s32.totalorder %v396, 0
        %vm505 = vcmp.eq.s32.totalorder %v397, 0
        %vm506 = vcmp.eq.s32.totalorder %v399, 0
        %vm507 = vmor %vm498, %vm506
        %vm508 = vmor %vm499, %vm506
        %vm509 = vmor %vm500, %vm506
        %vm510 = vmor %vm501, %vm506
        %vm511 = vmor %vm502, %vm506
        %vm512 = vmor %vm503, %vm506
        %vm513 = vmor %vm504, %vm506
        %vm514 = vmor %vm505, %vm506
        %v515 = vsel %vm507, 0.0, %v497
        %v516 = vsel %vm508, 0.0, %v496
        %v517 = vsel %vm509, 0.0, %v495
        %v518 = vsel %vm510, 0.0, %v494
        %v519 = vsel %vm511, 0.0, %v493
        %v520 = vsel %vm512, 0.0, %v492
        %v521 = vsel %vm513, 0.0, %v491
        %v522 = vsel %vm514, 0.0, %v490
        %523 = vrot.lane.b32.xlu0 %v441, 127
        %v524 = vpop.permute.xlu0 %523
        %525 = vrot.lane.b32.xlu0 %v442, 127
        %v526 = vpop.permute.xlu0 %525
        %527 = vrot.lane.b32.xlu0 %v443, 127
        %v528 = vpop.permute.xlu0 %527
        %529 = vrot.lane.b32.xlu0 %v444, 127
        %v530 = vpop.permute.xlu0 %529
        %531 = vrot.lane.b32.xlu0 %v445, 127
        %v532 = vpop.permute.xlu0 %531
        %533 = vrot.lane.b32.xlu0 %v446, 127
        %v534 = vpop.permute.xlu0 %533
        %535 = vrot.lane.b32.xlu0 %v447, 127
        %v536 = vpop.permute.xlu0 %535
        %537 = vrot.lane.b32.xlu0 %v448, 127
        %v538 = vpop.permute.xlu0 %537
        %v547 = vrot.slane %v524, 1
        %v548 = vrot.slane %v526, 1
        %v549 = vrot.slane %v528, 1
        %v550 = vrot.slane %v530, 1
        %v551 = vrot.slane %v532, 1
        %v552 = vrot.slane %v534, 1
        %v553 = vrot.slane %v536, 1
        %v554 = vrot.slane %v538, 1
        %vm555 = vcmp.lt.s32.totalorder %v390, 7
        %v556 = vsel %vm555, %v553, %v554
        %v557 = vsel %vm555, %v552, %v553
        %v558 = vsel %vm555, %v551, %v552
        %v559 = vsel %vm555, %v550, %v551
        %v560 = vsel %vm555, %v549, %v550
        %v561 = vsel %vm555, %v548, %v549
        %v562 = vsel %vm555, %v547, %v548
        %v563 = vsel %vm555, %v554, %v547
        %vm564 = vcmp.eq.s32.totalorder %v390, 63
        %vm565 = vcmp.eq.s32.totalorder %v391, 63
        %vm566 = vcmp.eq.s32.totalorder %v392, 63
        %vm567 = vcmp.eq.s32.totalorder %v393, 63
        %vm568 = vcmp.eq.s32.totalorder %v394, 63
        %vm569 = vcmp.eq.s32.totalorder %v395, 63
        %vm570 = vcmp.eq.s32.totalorder %v396, 63
        %vm571 = vcmp.eq.s32.totalorder %v397, 63
        %vm572 = vcmp.eq.s32.totalorder %v399, 63
        %vm573 = vmor %vm564, %vm572
        %vm574 = vmor %vm565, %vm572
        %vm575 = vmor %vm566, %vm572
        %vm576 = vmor %vm567, %vm572
        %vm577 = vmor %vm568, %vm572
        %vm578 = vmor %vm569, %vm572
        %vm579 = vmor %vm570, %vm572
        %vm580 = vmor %vm571, %vm572
        %v581 = vsel %vm573, 0.0, %v562
        %v582 = vsel %vm574, 0.0, %v561
        %v583 = vsel %vm575, 0.0, %v560
        %v584 = vsel %vm576, 0.0, %v559
        %v585 = vsel %vm577, 0.0, %v558
        %v586 = vsel %vm578, 0.0, %v557
        %v587 = vsel %vm579, 0.0, %v556
        %v588 = vsel %vm580, 0.0, %v563
        %v589 = vadd.f32 %v359, %v515
        %v590 = vadd.f32 %v362, %v516
        %v591 = vadd.f32 %v367, %v517
        %v592 = vadd.f32 %v370, %v518
        %v593 = vadd.f32 %v375, %v519
        %v594 = vadd.f32 %v378, %v520
        %v595 = vadd.f32 %v383, %v521
        %v596 = vadd.f32 %v386, %v522
        %v597 = vadd.f32 %v589, %v581
        %v598 = vadd.f32 %v590, %v582
        %v599 = vadd.f32 %v591, %v583
        %v600 = vadd.f32 %v592, %v584
        %v601 = vadd.f32 %v593, %v585
        %v602 = vadd.f32 %v594, %v586
        %v603 = vadd.f32 %v595, %v587
        %v604 = vadd.f32 %v596, %v588
        %vm605 = vcmask 523264
        %606 = vst.msk [vmem:[%s151] sm:$0xff] %vm605, %v597
        %607 = vst.msk [vmem:[%s151 + $0x8] sm:$0xff] %vm605, %v598
        %608 = vst.msk [vmem:[%s151 + $0x10] sm:$0xff] %vm605, %v599
        %609 = vst.msk [vmem:[%s151 + $0x18] sm:$0xff] %vm605, %v600
        %610 = vst.msk [vmem:[%s151 + $0x20] sm:$0xff] %vm605, %v601
        %611 = vst.msk [vmem:[%s151 + $0x28] sm:$0xff] %vm605, %v602
        %612 = vst.msk [vmem:[%s151 + $0x30] sm:$0xff] %vm605, %v603
        %613 = vst.msk [vmem:[%s151 + $0x38] sm:$0xff] %vm605, %v604
        %s614 = sand.u32 %s76, 1
        %s615 = scalar_lea.sflag [#allocation3], %s614
        %s616 = sand.u32 %s76, 1
        %s617 = smul.addr %s616, 64
        %s618 = scalar_lea.vmem [#allocation2], %s617
        // Predicated region
        $region29: #{tpu_custom_call.1} parent=27 // pred_check
          %p619 = pneg %p86
        $region30: #{tpu_custom_call.1} parent=27 // pred_check_branch
          %621 = sbr.rel (%p619) target = $region32
        $region31: #{tpu_custom_call.1} parent=27 // pred_region
          %s623 = ssub.s32 1024, 1024
          %624 = vsyncadd %s615, %s623
          %s625 = smul.addr %s16, 8
          %s626 = smul.addr %s625, 128
          %s627 = scalar_lea.hbm %s2, %s626
          %s628 = sshll.u32 %s618, 4
          %s629 = int_to_ptr.vmem [resolvable:$true] %s628
          %634 = dma.vmem_to_hbm [thread:$0]  %s629, 1024, %s627, %s615, 128, 128, 8
        $region32: #{tpu_custom_call.1} parent=27 // pred_fallthru
          _
      $region28: #{tpu_custom_call.1} parent=5 // pred_fallthru
        _
      %p635 = scmp.le.s32.totalorder 2, %s11
      // Predicated region
      $region33: #{tpu_custom_call.1} parent=5 // pred_check
        %p636 = pneg %p635
      $region34: #{tpu_custom_call.1} parent=5 // pred_check_branch
        %638 = sbr.rel (%p636) target = $region36
      $region35: #{tpu_custom_call.1} parent=5 // pred_region
        %s639 = ssub.s32 %s11, 2
        // Predicated region
        $region37: #{tpu_custom_call.1} parent=35 // pred_check
          %p640 = pneg %p92
        $region38: #{tpu_custom_call.1} parent=35 // pred_check_branch
          %642 = sbr.rel (%p640) target = $region40
        $region39: #{tpu_custom_call.1} parent=35 // pred_region
          %s643 = sand.u32 %s77, 1
          %s644 = scalar_lea.sflag [#allocation3], %s643
          %s645 = sand.u32 %s77, 1
          %s646 = smul.addr %s645, 64
          %s647 = scalar_lea.vmem [#allocation2], %s646
          %648 = dma.done %s644, 1024
        $region40: #{tpu_custom_call.1} parent=35 // pred_fallthru
          _
      $region36: #{tpu_custom_call.1} parent=5 // pred_fallthru
        _
    $region6: #{tpu_custom_call.1} parent=1 // loop_footer
      %s15 = sadd.s32 1, %s11
    $region7: #{tpu_custom_call.1} parent=1 // loop_footer_branch
      %10 = sbr.rel target = $region3
    $region8: #{tpu_custom_call.1} parent=1 // loop_exit
      _
    %649 = vsyncpa [#allocation3], 1
    %s650 = scalar_lea.sflag [#allocation3], 1
    %651 = vsyncpa %s650, 1

</llo_original>
